<compile_context>
chip_gen: v7x
topology: tpu7x:2x2x1
jax: 0.10.0
libtpu: 0.0.40
codegen_flags: <defaults>
</compile_context>

<pallas_src>
import functools
import math

import jax
import jax.numpy as jnp
from jax.experimental import pallas as pl
from jax.experimental.pallas import tpu as pltpu


def _round_up(a: int, b: int) -> int:
    return (a + b - 1) // b * b


# ----------------------------------------------------------------------------
# Pallas kernel: fused (patches @ weight) + bias (+ ReLU)   [one M-tile]
# ----------------------------------------------------------------------------
def _conv_matmul_kernel(p_ref, w_ref, b_ref, o_ref, *, apply_relu: bool):
    # p_ref: (TM, K_pad)   bf16 im2col patches tile
    # w_ref: (K_pad, O_pad) bf16 reshaped conv weight (resident across grid)
    # b_ref: (1, O_pad)     f32 bias
    # o_ref: (TM, O_pad)    f32, lane-dense (O_pad % 128 == 0)
    acc = jnp.dot(p_ref[...], w_ref[...], preferred_element_type=jnp.float32)
    acc = acc + b_ref[...]
    if apply_relu:
        acc = jnp.maximum(acc, 0.0)
    o_ref[...] = acc.astype(o_ref.dtype)


def _pallas_conv_matmul(patches, w2d, b2d, apply_relu: bool, tm: int):
    M_pad, K_pad = patches.shape
    _, O_pad = w2d.shape
    grid = (M_pad // tm,)

    flops = 2 * M_pad * K_pad * O_pad
    bytes_accessed = (patches.size * 2 + w2d.size * 2 + b2d.size * 4
                      + M_pad * O_pad * 4)

    return pl.pallas_call(
        functools.partial(_conv_matmul_kernel, apply_relu=apply_relu),
        out_shape=jax.ShapeDtypeStruct((M_pad, O_pad), jnp.float32),
        grid_spec=pltpu.PrefetchScalarGridSpec(
            num_scalar_prefetch=0,
            grid=grid,
            in_specs=[
                pl.BlockSpec((tm, K_pad), lambda i: (i, 0)),      # patches tile
                pl.BlockSpec((K_pad, O_pad), lambda i: (0, 0)),   # weight (resident)
                pl.BlockSpec((1, O_pad), lambda i: (0, 0)),       # bias   (resident)
            ],
            out_specs=pl.BlockSpec((tm, O_pad), lambda i: (i, 0)),
        ),
        compiler_params=pltpu.CompilerParams(
            dimension_semantics=("parallel",),       # megacore-shard the M loop
            vmem_limit_bytes=32 * 1024 * 1024,       # safe on v5e/v6e/v7x
        ),
        cost_estimate=pl.CostEstimate(
            flops=flops, transcendentals=0, bytes_accessed=bytes_accessed),
    )(patches, w2d, b2d)


# ----------------------------------------------------------------------------
# im2col glue (plain JAX): NHWC -> (N*Ho*Wo, kh*kw*C), column order (i, j, c)
# ----------------------------------------------------------------------------
def _im2col_nhwc(x, kh, kw, stride, pad):
    N, H, W, C = x.shape
    xp = jnp.pad(x, ((0, 0), (pad, pad), (pad, pad), (0, 0)))
    Ho = (H + 2 * pad - kh) // stride + 1
    Wo = (W + 2 * pad - kw) // stride + 1
    cols = []
    for i in range(kh):
        for j in range(kw):
            cols.append(xp[:, i:i + stride * Ho:stride,
                           j:j + stride * Wo:stride, :])
    # Channel-last concat => per-patch column order is (i, j, c); no transpose.
    patches = jnp.concatenate(cols, axis=-1)            # (N, Ho, Wo, kh*kw*C)
    return patches.reshape(N * Ho * Wo, kh * kw * C), Ho, Wo


def conv2d_pallas_nhwc(x, weight, bias, stride, pad, apply_relu, tm_target=512):
    """x: (N, H, W, C) NHWC; weight: (O, C, kh, kw) [PyTorch layout]; bias: (O,)."""
    N, H, W, C = x.shape
    O, _, kh, kw = weight.shape

    # bf16 MXU inputs (halves patch-matrix HBM traffic); accumulate in f32.
    xb = x.astype(jnp.bfloat16)
    patches, Ho, Wo = _im2col_nhwc(xb, kh, kw, stride, pad)
    M, K = patches.shape

    K_pad = _round_up(K, 16)                 # bf16 sublane-friendly contraction
    O_pad = _round_up(O, 128)                # lane-dense output stores
    TM = min(tm_target, _round_up(M, 8))     # M-tile (multiple of 8 sublanes)
    M_pad = _round_up(M, TM)

    patches = jnp.pad(patches, ((0, M_pad - M), (0, K_pad - K)))

    # weight (O, C, kh, kw) -> (kh, kw, C, O) -> (kh*kw*C, O): matches (i, j, c)
    # patch-column ordering used by _im2col_nhwc.
    w2d = jnp.transpose(weight, (2, 3, 1, 0)).reshape(kh * kw * C, O)
    w2d = jnp.pad(w2d, ((0, K_pad - K), (0, O_pad - O))).astype(jnp.bfloat16)
    b2d = jnp.pad(bias.astype(jnp.float32).reshape(1, O),
                  ((0, 0), (0, O_pad - O)))

    out = _pallas_conv_matmul(patches, w2d, b2d, apply_relu, TM)  # (M_pad, O_pad)
    # Drop row/channel padding outside the kernel; keep NHWC for the next layer.
    return out[:M, :O].reshape(N, Ho, Wo, O)


# ----------------------------------------------------------------------------
# CNN: sequential conv stack (equivalent of the PyTorch module's forward)
# ----------------------------------------------------------------------------
def xavier_uniform(key, shape, gain=1.0):
    # shape = (O, C, kh, kw); fan_in = C*kh*kw, fan_out = O*kh*kw
    O, C, kh, kw = shape
    fan_in, fan_out = C * kh * kw, O * kh * kw
    bound = gain * math.sqrt(6.0 / (fan_in + fan_out))
    return jax.random.uniform(key, shape, jnp.float32, -bound, bound)


def make_cnn_params(key, layer_cfgs, bias_init=0.0, gain=1.0):
    """Mirror of CNN.reset(): xavier_uniform_ weights, constant bias_init."""
    params = []
    for cfg in layer_cfgs:
        key, wk = jax.random.split(key)
        w = xavier_uniform(wk, (cfg["out_ch"], cfg["in_ch"], cfg["k"], cfg["k"]), gain)
        b = jnp.full((cfg["out_ch"],), bias_init, jnp.float32)
        params.append((w, b))
    return params


def make_cnn_forward(layer_cfgs):
    """Returns a jitted forward: NCHW in, NCHW out (PyTorch-compatible)."""
    def fwd(x, params):
        _x = jnp.transpose(x, (0, 2, 3, 1))              # NCHW -> NHWC (once)
        for (w, b), cfg in zip(params, layer_cfgs):
            _x = conv2d_pallas_nhwc(_x, w, b, cfg["stride"], cfg["pad"], cfg["relu"])
        return jnp.transpose(_x, (0, 3, 1, 2))           # NHWC -> NCHW (once)
    return jax.jit(fwd)


if __name__ == "__main__":
    # Small synthetic convolution_config: two Conv2d(+ReLU) layers.
    layer_cfgs = [
        dict(in_ch=4, out_ch=8, k=3, stride=1, pad=1, relu=True),
        dict(in_ch=8, out_ch=16, k=3, stride=2, pad=1, relu=True),
    ]
    key = jax.random.PRNGKey(0)
    key, xk = jax.random.split(key)
    x = jax.random.normal(xk, (2, 4, 16, 16), jnp.float32)  # NCHW, like PyTorch

    params = make_cnn_params(key, layer_cfgs, bias_init=0.0, gain=1.0)

    cnn_forward = make_cnn_forward(layer_cfgs)
    out = cnn_forward(x, params)
    out = jax.block_until_ready(out)
    assert out.shape == (2, 16, 8, 8), out.shape
    print("KERNEL_OK")
</pallas_src>

<mosaic_0001>
module attributes {stable_mosaic.version = 11 : i64} {
  func.func @_conv_matmul_kernel(%arg0: i32, %arg1: memref<512x48xbf16, #tpu.memory_space<vmem>>, %arg2: memref<48x128xbf16, #tpu.memory_space<vmem>>, %arg3: memref<1x128xf32, #tpu.memory_space<vmem>>, %arg4: memref<512x128xf32, #tpu.memory_space<vmem>>) attributes {dimension_semantics = [#tpu.dimension_semantics<parallel>], iteration_bounds = array<i64: 1>, scalar_prefetch = 0 : i64, scratch_operands = 0 : i64, tpu.core_type = #tpu.core_type<tc>, window_params = [{transform_indices = @transform_0, window_bounds = array<i64: 512, 48>}, {pipeline_mode = #tpu.pipeline_mode<synchronous>, transform_indices = @transform_1, window_bounds = array<i64: 48, 128>}, {pipeline_mode = #tpu.pipeline_mode<synchronous>, transform_indices = @transform_2, window_bounds = array<i64: 1, 128>}, {transform_indices = @transform_3, window_bounds = array<i64: 512, 128>}]} {
    %c0 = arith.constant 0 : index
    %c0_0 = arith.constant 0 : index
    %0 = vector.load %arg1[%c0, %c0_0] : memref<512x48xbf16, #tpu.memory_space<vmem>>, vector<512x48xbf16>
    %c0_1 = arith.constant 0 : index
    %c0_2 = arith.constant 0 : index
    %1 = vector.load %arg2[%c0_1, %c0_2] : memref<48x128xbf16, #tpu.memory_space<vmem>>, vector<48x128xbf16>
    %cst = arith.constant dense<0.000000e+00> : vector<512x128xf32>
    %2 = tpu.matmul %0, %1, %cst {dimension_numbers = #tpu.dot_dimension_numbers<[1], [0], [0], [1], [0, 0, 1, 1], [], []>} : vector<512x48xbf16>, vector<48x128xbf16>, vector<512x128xf32> -> vector<512x128xf32>
    %c0_3 = arith.constant 0 : index
    %c0_4 = arith.constant 0 : index
    %3 = vector.load %arg3[%c0_3, %c0_4] : memref<1x128xf32, #tpu.memory_space<vmem>>, vector<1x128xf32>
    %4 = vector.broadcast %3 : vector<1x128xf32> to vector<512x128xf32>
    %5 = arith.addf %2, %4 : vector<512x128xf32>
    %cst_5 = arith.constant 0.000000e+00 : f32
    %6 = vector.broadcast %cst_5 : f32 to vector<512x128xf32>
    %7 = arith.maximumf %5, %6 : vector<512x128xf32>
    %c0_6 = arith.constant 0 : index
    %c0_7 = arith.constant 0 : index
    %8 = vector.load %arg4[%c0_6, %c0_7] : memref<512x128xf32, #tpu.memory_space<vmem>>, vector<512x128xf32>
    tpu.vector_store %arg4[%c0_6, %c0_7], %7 {strides = array<i32>} : memref<512x128xf32, #tpu.memory_space<vmem>>, vector<512x128xf32>,
    return
  }
  func.func @transform_0(%arg0: i32) -> (i32, i32) {
    %c0_i32 = arith.constant 0 : i32
    %c0_i32_0 = arith.constant 0 : i32
    return %arg0, %c0_i32 : i32, i32
  }
  func.func @transform_1(%arg0: i32) -> (i32, i32) {
    %c0_i32 = arith.constant 0 : i32
    %c0_i32_0 = arith.constant 0 : i32
    %c0_i32_1 = arith.constant 0 : i32
    return %c0_i32, %c0_i32_0 : i32, i32
  }
  func.func @transform_2(%arg0: i32) -> (i32, i32) {
    %c0_i32 = arith.constant 0 : i32
    %c0_i32_0 = arith.constant 0 : i32
    %c0_i32_1 = arith.constant 0 : i32
    return %c0_i32, %c0_i32_0 : i32, i32
  }
  func.func @transform_3(%arg0: i32) -> (i32, i32) {
    %c0_i32 = arith.constant 0 : i32
    %c0_i32_0 = arith.constant 0 : i32
    return %arg0, %c0_i32 : i32, i32
  }
}

module attributes {stable_mosaic.version = 11 : i64} {
  func.func @_conv_matmul_kernel(%arg0: i32, %arg1: memref<128x80xbf16, #tpu.memory_space<vmem>>, %arg2: memref<80x128xbf16, #tpu.memory_space<vmem>>, %arg3: memref<1x128xf32, #tpu.memory_space<vmem>>, %arg4: memref<128x128xf32, #tpu.memory_space<vmem>>) attributes {dimension_semantics = [#tpu.dimension_semantics<parallel>], iteration_bounds = array<i64: 1>, scalar_prefetch = 0 : i64, scratch_operands = 0 : i64, tpu.core_type = #tpu.core_type<tc>, window_params = [{transform_indices = @transform_0, window_bounds = array<i64: 128, 80>}, {pipeline_mode = #tpu.pipeline_mode<synchronous>, transform_indices = @transform_1, window_bounds = array<i64: 80, 128>}, {pipeline_mode = #tpu.pipeline_mode<synchronous>, transform_indices = @transform_2, window_bounds = array<i64: 1, 128>}, {transform_indices = @transform_3, window_bounds = array<i64: 128, 128>}]} {
    %c0 = arith.constant 0 : index
    %c0_0 = arith.constant 0 : index
    %0 = vector.load %arg1[%c0, %c0_0] : memref<128x80xbf16, #tpu.memory_space<vmem>>, vector<128x80xbf16>
    %c0_1 = arith.constant 0 : index
    %c0_2 = arith.constant 0 : index
    %1 = vector.load %arg2[%c0_1, %c0_2] : memref<80x128xbf16, #tpu.memory_space<vmem>>, vector<80x128xbf16>
    %cst = arith.constant dense<0.000000e+00> : vector<128x128xf32>
    %2 = tpu.matmul %0, %1, %cst {dimension_numbers = #tpu.dot_dimension_numbers<[1], [0], [0], [1], [0, 0, 1, 1], [], []>} : vector<128x80xbf16>, vector<80x128xbf16>, vector<128x128xf32> -> vector<128x128xf32>
    %c0_3 = arith.constant 0 : index
    %c0_4 = arith.constant 0 : index
    %3 = vector.load %arg3[%c0_3, %c0_4] : memref<1x128xf32, #tpu.memory_space<vmem>>, vector<1x128xf32>
    %4 = vector.broadcast %3 : vector<1x128xf32> to vector<128x128xf32>
    %5 = arith.addf %2, %4 : vector<128x128xf32>
    %cst_5 = arith.constant 0.000000e+00 : f32
    %6 = vector.broadcast %cst_5 : f32 to vector<128x128xf32>
    %7 = arith.maximumf %5, %6 : vector<128x128xf32>
    %c0_6 = arith.constant 0 : index
    %c0_7 = arith.constant 0 : index
    %8 = vector.load %arg4[%c0_6, %c0_7] : memref<128x128xf32, #tpu.memory_space<vmem>>, vector<128x128xf32>
    tpu.vector_store %arg4[%c0_6, %c0_7], %7 {strides = array<i32>} : memref<128x128xf32, #tpu.memory_space<vmem>>, vector<128x128xf32>,
    return
  }
  func.func @transform_0(%arg0: i32) -> (i32, i32) {
    %c0_i32 = arith.constant 0 : i32
    %c0_i32_0 = arith.constant 0 : i32
    return %arg0, %c0_i32 : i32, i32
  }
  func.func @transform_1(%arg0: i32) -> (i32, i32) {
    %c0_i32 = arith.constant 0 : i32
    %c0_i32_0 = arith.constant 0 : i32
    %c0_i32_1 = arith.constant 0 : i32
    return %c0_i32, %c0_i32_0 : i32, i32
  }
  func.func @transform_2(%arg0: i32) -> (i32, i32) {
    %c0_i32 = arith.constant 0 : i32
    %c0_i32_0 = arith.constant 0 : i32
    %c0_i32_1 = arith.constant 0 : i32
    return %c0_i32, %c0_i32_0 : i32, i32
  }
  func.func @transform_3(%arg0: i32) -> (i32, i32) {
    %c0_i32 = arith.constant 0 : i32
    %c0_i32_0 = arith.constant 0 : i32
    return %arg0, %c0_i32 : i32, i32
  }
}

</mosaic_0001>

<llo_original>
// kernel: fwd.2
$region0: #{fwd.2}
  #allocation0 [shape = 'u32[]', space=smem, size = 0x4, offset = 0x4, fixed_abs, tag = 'smem constant byte address 0x4 - core index']
  #allocation1 [shape = 'u32[144,128]{1,0:T(1,128)}', space=vmem, size = 0x12000, scoped, tag = 'internal scratch']
  %s0 = inlined_call_operand.vmem [shape: bf16[512,48], index: 0, kind: input, shape index: {}]
  %s1 = inlined_call_operand.vmem [shape: bf16[48,128], index: 1, kind: input, shape index: {}]
  %s2 = inlined_call_operand.vmem [shape: f32[1,128], index: 2, kind: input, shape index: {}]
  %s3 = inlined_call_operand.vmem [shape: f32[512,128], index: 3, kind: output, shape index: {}]
  %s4 = sld [smem:[#allocation0]]
  $region22: #{fwd.2} parent=0
    _
  %s6 = ssub.s32 1, %s4
  %s7 = scalar_select 0, %s6, %s4
  // Predicated region
  $region2: #{fwd.2} parent=0 // pred_check
    _
  $region3: #{fwd.2} parent=0 // pred_check_branch
    %9 = sbr.rel (0) target = $region5
  $region4: #{fwd.2} parent=0 // pred_region
    _
  $region5: #{fwd.2} parent=0 // pred_fallthru
    _
  // Predicated region
  $region6: #{fwd.2} parent=0 // pred_check
    _
  $region7: #{fwd.2} parent=0 // pred_check_branch
    %11 = sbr.rel (0) target = $region9
  $region8: #{fwd.2} parent=0 // pred_region
    _
  $region9: #{fwd.2} parent=0 // pred_fallthru
    _
  // Predicated region
  $region10: #{fwd.2} parent=0 // pred_check
    _
  $region11: #{fwd.2} parent=0 // pred_check_branch
    %13 = sbr.rel (0) target = $region13
  $region12: #{fwd.2} parent=0 // pred_region
    _
  $region13: #{fwd.2} parent=0 // pred_fallthru
    _
  %v15 = vld [vmem:[%s0] sm:$0xf]
  %v16 = vld [vmem:[%s0 + $0x4] sm:$0xf]
  %v17 = vld [vmem:[%s0 + $0x8] sm:$0xf]
  %v18 = vld [vmem:[%s0 + $0xc] sm:$0xf]
  %v19 = vld [vmem:[%s0 + $0x10] sm:$0xf]
  %v20 = vld [vmem:[%s0 + $0x14] sm:$0xf]
  %v21 = vld [vmem:[%s0 + $0x18] sm:$0xf]
  %v22 = vld [vmem:[%s0 + $0x1c] sm:$0xf]
  %v23 = vld [vmem:[%s0 + $0x20] sm:$0xf]
  %v24 = vld [vmem:[%s0 + $0x24] sm:$0xf]
  %v25 = vld [vmem:[%s0 + $0x28] sm:$0xf]
  %v26 = vld [vmem:[%s0 + $0x2c] sm:$0xf]
  %v27 = vld [vmem:[%s0 + $0x30] sm:$0xf]
  %v28 = vld [vmem:[%s0 + $0x34] sm:$0xf]
  %v29 = vld [vmem:[%s0 + $0x38] sm:$0xf]
  %v30 = vld [vmem:[%s0 + $0x3c] sm:$0xf]
  %v31 = vld [vmem:[%s0 + $0x40] sm:$0xf]
  %v32 = vld [vmem:[%s0 + $0x44] sm:$0xf]
  %v33 = vld [vmem:[%s0 + $0x48] sm:$0xf]
  %v34 = vld [vmem:[%s0 + $0x4c] sm:$0xf]
  %v35 = vld [vmem:[%s0 + $0x50] sm:$0xf]
  %v36 = vld [vmem:[%s0 + $0x54] sm:$0xf]
  %v37 = vld [vmem:[%s0 + $0x58] sm:$0xf]
  %v38 = vld [vmem:[%s0 + $0x5c] sm:$0xf]
  %v39 = vld [vmem:[%s0 + $0x60] sm:$0xf]
  %v40 = vld [vmem:[%s0 + $0x64] sm:$0xf]
  %v41 = vld [vmem:[%s0 + $0x68] sm:$0xf]
  %v42 = vld [vmem:[%s0 + $0x6c] sm:$0xf]
  %v43 = vld [vmem:[%s0 + $0x70] sm:$0xf]
  %v44 = vld [vmem:[%s0 + $0x74] sm:$0xf]
  %v45 = vld [vmem:[%s0 + $0x78] sm:$0xf]
  %v46 = vld [vmem:[%s0 + $0x7c] sm:$0xf]
  %v47 = vld [vmem:[%s0 + $0x80] sm:$0xf]
  %v48 = vld [vmem:[%s0 + $0x84] sm:$0xf]
  %v49 = vld [vmem:[%s0 + $0x88] sm:$0xf]
  %v50 = vld [vmem:[%s0 + $0x8c] sm:$0xf]
  %v51 = vld [vmem:[%s0 + $0x90] sm:$0xf]
  %v52 = vld [vmem:[%s0 + $0x94] sm:$0xf]
  %v53 = vld [vmem:[%s0 + $0x98] sm:$0xf]
  %v54 = vld [vmem:[%s0 + $0x9c] sm:$0xf]
  %v55 = vld [vmem:[%s0 + $0xa0] sm:$0xf]
  %v56 = vld [vmem:[%s0 + $0xa4] sm:$0xf]
  %v57 = vld [vmem:[%s0 + $0xa8] sm:$0xf]
  %v58 = vld [vmem:[%s0 + $0xac] sm:$0xf]
  %v59 = vld [vmem:[%s0 + $0xb0] sm:$0xf]
  %v60 = vld [vmem:[%s0 + $0xb4] sm:$0xf]
  %v61 = vld [vmem:[%s0 + $0xb8] sm:$0xf]
  %v62 = vld [vmem:[%s0 + $0xbc] sm:$0xf]
  %v63 = vld [vmem:[%s0 + $0xc0] sm:$0xf]
  %v64 = vld [vmem:[%s0 + $0xc4] sm:$0xf]
  %v65 = vld [vmem:[%s0 + $0xc8] sm:$0xf]
  %v66 = vld [vmem:[%s0 + $0xcc] sm:$0xf]
  %v67 = vld [vmem:[%s0 + $0xd0] sm:$0xf]
  %v68 = vld [vmem:[%s0 + $0xd4] sm:$0xf]
  %v69 = vld [vmem:[%s0 + $0xd8] sm:$0xf]
  %v70 = vld [vmem:[%s0 + $0xdc] sm:$0xf]
  %v71 = vld [vmem:[%s0 + $0xe0] sm:$0xf]
  %v72 = vld [vmem:[%s0 + $0xe4] sm:$0xf]
  %v73 = vld [vmem:[%s0 + $0xe8] sm:$0xf]
  %v74 = vld [vmem:[%s0 + $0xec] sm:$0xf]
  %v75 = vld [vmem:[%s0 + $0xf0] sm:$0xf]
  %v76 = vld [vmem:[%s0 + $0xf4] sm:$0xf]
  %v77 = vld [vmem:[%s0 + $0xf8] sm:$0xf]
  %v78 = vld [vmem:[%s0 + $0xfc] sm:$0xf]
  %v79 = vld [vmem:[%s1] sm:$0xf]
  %v80 = vld [vmem:[%s1 + $0x4] sm:$0xf]
  %v81 = vld [vmem:[%s1 + $0x8] sm:$0xf]
  %v82 = vld [vmem:[%s1 + $0xc] sm:$0xf]
  %v83 = vld [vmem:[%s1 + $0x10] sm:$0xf]
  %v84 = vld [vmem:[%s1 + $0x14] sm:$0xf]
  %v85 = vld [vmem:[%s2] sm:$0x1]
  %v87 = vlaneseq
  %v88 = vshrl.u32 %v87, 7
  %v89 = vsub.s32 0, %v88
  %v90 = vrot.slane %v85, %v89
  %v156 = vunpack.c.l.b16 %v15
  %v157 = vunpack.c.l.b16 %v16
  %v158 = vunpack.c.l.b16 %v17
  %v159 = vunpack.c.l.b16 %v18
  %v160 = vunpack.c.l.b16 %v19
  %v161 = vunpack.c.l.b16 %v20
  %v162 = vunpack.c.l.b16 %v21
  %v163 = vunpack.c.l.b16 %v22
  %v164 = vunpack.c.l.b16 %v23
  %v165 = vunpack.c.l.b16 %v24
  %v166 = vunpack.c.l.b16 %v25
  %v167 = vunpack.c.l.b16 %v26
  %v168 = vunpack.c.l.b16 %v27
  %v169 = vunpack.c.l.b16 %v28
  %v170 = vunpack.c.l.b16 %v29
  %v171 = vunpack.c.l.b16 %v30
  %v172 = vunpack.c.l.b16 %v31
  %v173 = vunpack.c.l.b16 %v32
  %v174 = vunpack.c.l.b16 %v33
  %v175 = vunpack.c.l.b16 %v34
  %v176 = vunpack.c.l.b16 %v35
  %v177 = vunpack.c.l.b16 %v36
  %v178 = vunpack.c.l.b16 %v37
  %v179 = vunpack.c.l.b16 %v38
  %v180 = vunpack.c.l.b16 %v39
  %v181 = vunpack.c.l.b16 %v40
  %v182 = vunpack.c.l.b16 %v41
  %v183 = vunpack.c.l.b16 %v42
  %v184 = vunpack.c.l.b16 %v43
  %v185 = vunpack.c.l.b16 %v44
  %v186 = vunpack.c.l.b16 %v45
  %v187 = vunpack.c.l.b16 %v46
  %v188 = vunpack.c.l.b16 %v47
  %v189 = vunpack.c.l.b16 %v48
  %v190 = vunpack.c.l.b16 %v49
  %v191 = vunpack.c.l.b16 %v50
  %v192 = vunpack.c.l.b16 %v51
  %v193 = vunpack.c.l.b16 %v52
  %v194 = vunpack.c.l.b16 %v53
  %v195 = vunpack.c.l.b16 %v54
  %v196 = vunpack.c.l.b16 %v55
  %v197 = vunpack.c.l.b16 %v56
  %v198 = vunpack.c.l.b16 %v57
  %v199 = vunpack.c.l.b16 %v58
  %v200 = vunpack.c.l.b16 %v59
  %v201 = vunpack.c.l.b16 %v60
  %v202 = vunpack.c.l.b16 %v61
  %v203 = vunpack.c.l.b16 %v62
  %v204 = vunpack.c.l.b16 %v63
  %v205 = vunpack.c.l.b16 %v64
  %v206 = vunpack.c.l.b16 %v65
  %v207 = vunpack.c.l.b16 %v66
  %v208 = vunpack.c.l.b16 %v67
  %v209 = vunpack.c.l.b16 %v68
  %v210 = vunpack.c.l.b16 %v69
  %v211 = vunpack.c.l.b16 %v70
  %v212 = vunpack.c.l.b16 %v71
  %v213 = vunpack.c.l.b16 %v72
  %v214 = vunpack.c.l.b16 %v73
  %v215 = vunpack.c.l.b16 %v74
  %v216 = vunpack.c.l.b16 %v75
  %v217 = vunpack.c.l.b16 %v76
  %v218 = vunpack.c.l.b16 %v77
  %v219 = vunpack.c.l.b16 %v78
  %v220 = vpack.c.b16 %v157, %v156
  %v221 = vpack.c.b16 %v159, %v158
  %v222 = vpack.c.b16 %v161, %v160
  %v223 = vpack.c.b16 %v163, %v162
  %v224 = vpack.c.b16 %v165, %v164
  %v225 = vpack.c.b16 %v167, %v166
  %v226 = vpack.c.b16 %v169, %v168
  %v227 = vpack.c.b16 %v171, %v170
  %v228 = vpack.c.b16 %v173, %v172
  %v229 = vpack.c.b16 %v175, %v174
  %v230 = vpack.c.b16 %v177, %v176
  %v231 = vpack.c.b16 %v179, %v178
  %v232 = vpack.c.b16 %v181, %v180
  %v233 = vpack.c.b16 %v183, %v182
  %v234 = vpack.c.b16 %v185, %v184
  %v235 = vpack.c.b16 %v187, %v186
  %v236 = vpack.c.b16 %v189, %v188
  %v237 = vpack.c.b16 %v191, %v190
  %v238 = vpack.c.b16 %v193, %v192
  %v239 = vpack.c.b16 %v195, %v194
  %v240 = vpack.c.b16 %v197, %v196
  %v241 = vpack.c.b16 %v199, %v198
  %v242 = vpack.c.b16 %v201, %v200
  %v243 = vpack.c.b16 %v203, %v202
  %v244 = vpack.c.b16 %v205, %v204
  %v245 = vpack.c.b16 %v207, %v206
  %v246 = vpack.c.b16 %v209, %v208
  %v247 = vpack.c.b16 %v211, %v210
  %v248 = vpack.c.b16 %v213, %v212
  %v249 = vpack.c.b16 %v215, %v214
  %v250 = vpack.c.b16 %v217, %v216
  %v251 = vpack.c.b16 %v219, %v218
  %v258 = vunpack.c.l.b16 %v79
  %v259 = vunpack.c.l.b16 %v80
  %v260 = vunpack.c.l.b16 %v81
  %v261 = vunpack.c.l.b16 %v82
  %v262 = vunpack.c.l.b16 %v83
  %v263 = vunpack.c.l.b16 %v84
  %v264 = vpack.c.b16 %v259, %v258
  %v265 = vpack.c.b16 %v261, %v260
  %v266 = vpack.c.b16 %v263, %v262
  %vm270 = vcmask 392192
  %v272 = vsel %vm270, %v220, 0
  %v275 = vsel %vm270, %v221, 0
  %v278 = vsel %vm270, %v222, 0
  %v281 = vsel %vm270, %v223, 0
  %v284 = vsel %vm270, %v224, 0
  %v287 = vsel %vm270, %v225, 0
  %v290 = vsel %vm270, %v226, 0
  %v293 = vsel %vm270, %v227, 0
  %v296 = vsel %vm270, %v228, 0
  %v299 = vsel %vm270, %v229, 0
  %v302 = vsel %vm270, %v230, 0
  %v305 = vsel %vm270, %v231, 0
  %v308 = vsel %vm270, %v232, 0
  %v311 = vsel %vm270, %v233, 0
  %v314 = vsel %vm270, %v234, 0
  %v317 = vsel %vm270, %v235, 0
  %v320 = vsel %vm270, %v236, 0
  %v323 = vsel %vm270, %v237, 0
  %v326 = vsel %vm270, %v238, 0
  %v329 = vsel %vm270, %v239, 0
  %v332 = vsel %vm270, %v240, 0
  %v335 = vsel %vm270, %v241, 0
  %v338 = vsel %vm270, %v242, 0
  %v341 = vsel %vm270, %v243, 0
  %v344 = vsel %vm270, %v244, 0
  %v347 = vsel %vm270, %v245, 0
  %v350 = vsel %vm270, %v246, 0
  %v353 = vsel %vm270, %v247, 0
  %v356 = vsel %vm270, %v248, 0
  %v359 = vsel %vm270, %v249, 0
  %v362 = vsel %vm270, %v250, 0
  %v365 = vsel %vm270, %v251, 0
  %367 = vmatprep.subr.bf16.mxu0 0
  %368 = vmatpush1.bf16.msra.mxu0 %v264
  %369 = vmatprep.subr.bf16.mxu0 0
  %370 = vmatpush1.bf16.msra.mxu0 %v265
  %371 = vmatprep.subr.bf16.mxu0 0
  %372 = vmatpush1.bf16.msra.mxu0 %v266
  %373 = vmatprep.subr.bf16.mxu0 0
  %374 = vmatpush1.bf16.msra.mxu0 0
  %375 = vmatprep.subr.bf16.mxu0 0
  %376 = vmatpush1.bf16.msra.mxu0 0
  %377 = vmatprep.subr.bf16.mxu0 0
  %378 = vmatpush1.bf16.msra.mxu0 0
  %379 = vmatprep.subr.bf16.mxu0 0
  %380 = vmatpush1.bf16.msra.mxu0 0
  %381 = vmatprep.subr.bf16.mxu0 0
  %382 = vmatpush1.bf16.msra.mxu0 0
  %383 = vmatprep.subr.bf16.mxu0 0
  %384 = vmatpush1.bf16.msra.mxu0 0
  %385 = vmatprep.subr.bf16.mxu0 0
  %386 = vmatpush1.bf16.msra.mxu0 0
  %387 = vmatprep.subr.bf16.mxu0 0
  %388 = vmatpush1.bf16.msra.mxu0 0
  %389 = vmatprep.subr.bf16.mxu0 0
  %390 = vmatpush1.bf16.msra.mxu0 0
  %391 = vmatprep.subr.bf16.mxu0 0
  %392 = vmatpush1.bf16.msra.mxu0 0
  %393 = vmatprep.subr.bf16.mxu0 0
  %394 = vmatpush1.bf16.msra.mxu0 0
  %395 = vmatprep.subr.bf16.mxu0 0
  %396 = vmatpush1.bf16.msra.mxu0 0
  %397 = vmatprep.subr.bf16.mxu0 0
  %398 = vmatpush1.bf16.msra.mxu0 0
  %399 = vmatprep.mubr.bf16.mxu0 0
  %400 = vmatmul.mubr.bf16.gmra.mrb[0].mxu0 %v272
  %v401 = vpop.f32.mrb[0].mxu0
  %v402 = vadd.f32 %v90, %v401
  %v403 = vpop.f32.mrb[0].mxu0
  %v404 = vpop.f32.mrb[0].mxu0
  %v405 = vadd.f32 %v90, %v404
  %v406 = vpop.f32.mrb[0].mxu0
  %407 = vmatprep.mubr.bf16.mxu0 0
  %408 = vmatmul.mubr.bf16.gmra.mrb[0].mxu0 %v275
  %v409 = vpop.f32.mrb[0].mxu0
  %v410 = vadd.f32 %v90, %v409
  %v411 = vpop.f32.mrb[0].mxu0
  %v412 = vpop.f32.mrb[0].mxu0
  %v413 = vadd.f32 %v90, %v412
  %v414 = vpop.f32.mrb[0].mxu0
  %415 = vmatprep.mubr.bf16.mxu0 0
  %416 = vmatmul.mubr.bf16.gmra.mrb[0].mxu0 %v278
  %v417 = vpop.f32.mrb[0].mxu0
  %v418 = vadd.f32 %v90, %v417
  %v419 = vpop.f32.mrb[0].mxu0
  %v420 = vpop.f32.mrb[0].mxu0
  %v421 = vadd.f32 %v90, %v420
  %v422 = vpop.f32.mrb[0].mxu0
  %423 = vmatprep.mubr.bf16.mxu0 0
  %424 = vmatmul.mubr.bf16.gmra.mrb[0].mxu0 %v281
  %v425 = vpop.f32.mrb[0].mxu0
  %v426 = vadd.f32 %v90, %v425
  %v427 = vpop.f32.mrb[0].mxu0
  %v428 = vpop.f32.mrb[0].mxu0
  %v429 = vadd.f32 %v90, %v428
  %v430 = vpop.f32.mrb[0].mxu0
  %431 = vmatprep.mubr.bf16.mxu0 0
  %432 = vmatmul.mubr.bf16.gmra.mrb[0].mxu0 %v284
  %v433 = vpop.f32.mrb[0].mxu0
  %v434 = vadd.f32 %v90, %v433
  %v435 = vpop.f32.mrb[0].mxu0
  %v436 = vpop.f32.mrb[0].mxu0
  %v437 = vadd.f32 %v90, %v436
  %v438 = vpop.f32.mrb[0].mxu0
  %439 = vmatprep.mubr.bf16.mxu0 0
  %440 = vmatmul.mubr.bf16.gmra.mrb[0].mxu0 %v287
  %v441 = vpop.f32.mrb[0].mxu0
  %v442 = vadd.f32 %v90, %v441
  %v443 = vpop.f32.mrb[0].mxu0
  %v444 = vpop.f32.mrb[0].mxu0
  %v445 = vadd.f32 %v90, %v444
  %v446 = vpop.f32.mrb[0].mxu0
  %447 = vmatprep.mubr.bf16.mxu0 0
  %448 = vmatmul.mubr.bf16.gmra.mrb[0].mxu0 %v290
  %v449 = vpop.f32.mrb[0].mxu0
  %v450 = vadd.f32 %v90, %v449
  %v451 = vpop.f32.mrb[0].mxu0
  %v452 = vpop.f32.mrb[0].mxu0
  %v453 = vadd.f32 %v90, %v452
  %v454 = vpop.f32.mrb[0].mxu0
  %455 = vmatprep.mubr.bf16.mxu0 0
  %456 = vmatmul.mubr.bf16.gmra.mrb[0].mxu0 %v293
  %v457 = vpop.f32.mrb[0].mxu0
  %v458 = vadd.f32 %v90, %v457
  %v459 = vpop.f32.mrb[0].mxu0
  %v460 = vpop.f32.mrb[0].mxu0
  %v461 = vadd.f32 %v90, %v460
  %v462 = vpop.f32.mrb[0].mxu0
  %463 = vmatprep.mubr.bf16.mxu0 0
  %464 = vmatmul.mubr.bf16.gmra.mrb[0].mxu0 %v296
  %v465 = vpop.f32.mrb[0].mxu0
  %v466 = vadd.f32 %v90, %v465
  %v467 = vpop.f32.mrb[0].mxu0
  %v468 = vpop.f32.mrb[0].mxu0
  %v469 = vadd.f32 %v90, %v468
  %v470 = vpop.f32.mrb[0].mxu0
  %471 = vmatprep.mubr.bf16.mxu0 0
  %472 = vmatmul.mubr.bf16.gmra.mrb[0].mxu0 %v299
  %v473 = vpop.f32.mrb[0].mxu0
  %v474 = vadd.f32 %v90, %v473
  %v475 = vpop.f32.mrb[0].mxu0
  %v476 = vpop.f32.mrb[0].mxu0
  %v477 = vadd.f32 %v90, %v476
  %v478 = vpop.f32.mrb[0].mxu0
  %479 = vmatprep.mubr.bf16.mxu0 0
  %480 = vmatmul.mubr.bf16.gmra.mrb[0].mxu0 %v302
  %v481 = vpop.f32.mrb[0].mxu0
  %v482 = vadd.f32 %v90, %v481
  %v483 = vpop.f32.mrb[0].mxu0
  %v484 = vpop.f32.mrb[0].mxu0
  %v485 = vadd.f32 %v90, %v484
  %v486 = vpop.f32.mrb[0].mxu0
  %487 = vmatprep.mubr.bf16.mxu0 0
  %488 = vmatmul.mubr.bf16.gmra.mrb[0].mxu0 %v305
  %v489 = vpop.f32.mrb[0].mxu0
  %v490 = vadd.f32 %v90, %v489
  %v491 = vpop.f32.mrb[0].mxu0
  %v492 = vpop.f32.mrb[0].mxu0
  %v493 = vadd.f32 %v90, %v492
  %v494 = vpop.f32.mrb[0].mxu0
  %495 = vmatprep.mubr.bf16.mxu0 0
  %496 = vmatmul.mubr.bf16.gmra.mrb[0].mxu0 %v308
  %v497 = vpop.f32.mrb[0].mxu0
  %v498 = vadd.f32 %v90, %v497
  %v499 = vpop.f32.mrb[0].mxu0
  %v500 = vpop.f32.mrb[0].mxu0
  %v501 = vadd.f32 %v90, %v500
  %v502 = vpop.f32.mrb[0].mxu0
  %503 = vmatprep.mubr.bf16.mxu0 0
  %504 = vmatmul.mubr.bf16.gmra.mrb[0].mxu0 %v311
  %v505 = vpop.f32.mrb[0].mxu0
  %v506 = vadd.f32 %v90, %v505
  %v507 = vpop.f32.mrb[0].mxu0
  %v508 = vpop.f32.mrb[0].mxu0
  %v509 = vadd.f32 %v90, %v508
  %v510 = vpop.f32.mrb[0].mxu0
  %511 = vmatprep.mubr.bf16.mxu0 0
  %512 = vmatmul.mubr.bf16.gmra.mrb[0].mxu0 %v314
  %v513 = vpop.f32.mrb[0].mxu0
  %v514 = vadd.f32 %v90, %v513
  %v515 = vpop.f32.mrb[0].mxu0
  %v516 = vpop.f32.mrb[0].mxu0
  %v517 = vadd.f32 %v90, %v516
  %v518 = vpop.f32.mrb[0].mxu0
  %519 = vmatprep.mubr.bf16.mxu0 0
  %520 = vmatmul.mubr.bf16.gmra.mrb[0].mxu0 %v317
  %v521 = vpop.f32.mrb[0].mxu0
  %v522 = vadd.f32 %v90, %v521
  %v523 = vpop.f32.mrb[0].mxu0
  %v524 = vpop.f32.mrb[0].mxu0
  %v525 = vadd.f32 %v90, %v524
  %v526 = vpop.f32.mrb[0].mxu0
  %527 = vmatprep.mubr.bf16.mxu0 0
  %528 = vmatmul.mubr.bf16.gmra.mrb[0].mxu0 %v320
  %v529 = vpop.f32.mrb[0].mxu0
  %v530 = vadd.f32 %v90, %v529
  %v531 = vpop.f32.mrb[0].mxu0
  %v532 = vpop.f32.mrb[0].mxu0
  %v533 = vadd.f32 %v90, %v532
  %v534 = vpop.f32.mrb[0].mxu0
  %535 = vmatprep.mubr.bf16.mxu0 0
  %536 = vmatmul.mubr.bf16.gmra.mrb[0].mxu0 %v323
  %v537 = vpop.f32.mrb[0].mxu0
  %v538 = vadd.f32 %v90, %v537
  %v539 = vpop.f32.mrb[0].mxu0
  %v540 = vpop.f32.mrb[0].mxu0
  %v541 = vadd.f32 %v90, %v540
  %v542 = vpop.f32.mrb[0].mxu0
  %543 = vmatprep.mubr.bf16.mxu0 0
  %544 = vmatmul.mubr.bf16.gmra.mrb[0].mxu0 %v326
  %v545 = vpop.f32.mrb[0].mxu0
  %v546 = vadd.f32 %v90, %v545
  %v547 = vpop.f32.mrb[0].mxu0
  %v548 = vpop.f32.mrb[0].mxu0
  %v549 = vadd.f32 %v90, %v548
  %v550 = vpop.f32.mrb[0].mxu0
  %551 = vmatprep.mubr.bf16.mxu0 0
  %552 = vmatmul.mubr.bf16.gmra.mrb[0].mxu0 %v329
  %v553 = vpop.f32.mrb[0].mxu0
  %v554 = vadd.f32 %v90, %v553
  %v555 = vpop.f32.mrb[0].mxu0
  %v556 = vpop.f32.mrb[0].mxu0
  %v557 = vadd.f32 %v90, %v556
  %v558 = vpop.f32.mrb[0].mxu0
  %559 = vmatprep.mubr.bf16.mxu0 0
  %560 = vmatmul.mubr.bf16.gmra.mrb[0].mxu0 %v332
  %v561 = vpop.f32.mrb[0].mxu0
  %v562 = vadd.f32 %v90, %v561
  %v563 = vpop.f32.mrb[0].mxu0
  %v564 = vpop.f32.mrb[0].mxu0
  %v565 = vadd.f32 %v90, %v564
  %v566 = vpop.f32.mrb[0].mxu0
  %567 = vmatprep.mubr.bf16.mxu0 0
  %568 = vmatmul.mubr.bf16.gmra.mrb[0].mxu0 %v335
  %v569 = vpop.f32.mrb[0].mxu0
  %v570 = vadd.f32 %v90, %v569
  %v571 = vpop.f32.mrb[0].mxu0
  %v572 = vpop.f32.mrb[0].mxu0
  %v573 = vadd.f32 %v90, %v572
  %v574 = vpop.f32.mrb[0].mxu0
  %575 = vmatprep.mubr.bf16.mxu0 0
  %576 = vmatmul.mubr.bf16.gmra.mrb[0].mxu0 %v338
  %v577 = vpop.f32.mrb[0].mxu0
  %v578 = vadd.f32 %v90, %v577
  %v579 = vpop.f32.mrb[0].mxu0
  %v580 = vpop.f32.mrb[0].mxu0
  %v581 = vadd.f32 %v90, %v580
  %v582 = vpop.f32.mrb[0].mxu0
  %583 = vmatprep.mubr.bf16.mxu0 0
  %584 = vmatmul.mubr.bf16.gmra.mrb[0].mxu0 %v341
  %v585 = vpop.f32.mrb[0].mxu0
  %v586 = vadd.f32 %v90, %v585
  %v587 = vpop.f32.mrb[0].mxu0
  %v588 = vpop.f32.mrb[0].mxu0
  %v589 = vadd.f32 %v90, %v588
  %v590 = vpop.f32.mrb[0].mxu0
  %591 = vmatprep.mubr.bf16.mxu0 0
  %592 = vmatmul.mubr.bf16.gmra.mrb[0].mxu0 %v344
  %v593 = vpop.f32.mrb[0].mxu0
  %v594 = vadd.f32 %v90, %v593
  %v595 = vpop.f32.mrb[0].mxu0
  %v596 = vpop.f32.mrb[0].mxu0
  %v597 = vadd.f32 %v90, %v596
  %v598 = vpop.f32.mrb[0].mxu0
  %599 = vmatprep.mubr.bf16.mxu0 0
  %600 = vmatmul.mubr.bf16.gmra.mrb[0].mxu0 %v347
  %v601 = vpop.f32.mrb[0].mxu0
  %v602 = vadd.f32 %v90, %v601
  %v603 = vpop.f32.mrb[0].mxu0
  %v604 = vpop.f32.mrb[0].mxu0
  %v605 = vadd.f32 %v90, %v604
  %v606 = vpop.f32.mrb[0].mxu0
  %607 = vmatprep.mubr.bf16.mxu0 0
  %608 = vmatmul.mubr.bf16.gmra.mrb[0].mxu0 %v350
  %v609 = vpop.f32.mrb[0].mxu0
  %v610 = vadd.f32 %v90, %v609
  %v611 = vpop.f32.mrb[0].mxu0
  %v612 = vpop.f32.mrb[0].mxu0
  %v613 = vadd.f32 %v90, %v612
  %v614 = vpop.f32.mrb[0].mxu0
  %615 = vmatprep.mubr.bf16.mxu0 0
  %616 = vmatmul.mubr.bf16.gmra.mrb[0].mxu0 %v353
  %v617 = vpop.f32.mrb[0].mxu0
  %v618 = vadd.f32 %v90, %v617
  %v619 = vpop.f32.mrb[0].mxu0
  %v620 = vpop.f32.mrb[0].mxu0
  %v621 = vadd.f32 %v90, %v620
  %v622 = vpop.f32.mrb[0].mxu0
  %623 = vmatprep.mubr.bf16.mxu0 0
  %624 = vmatmul.mubr.bf16.gmra.mrb[0].mxu0 %v356
  %v625 = vpop.f32.mrb[0].mxu0
  %v626 = vadd.f32 %v90, %v625
  %v627 = vpop.f32.mrb[0].mxu0
  %v628 = vpop.f32.mrb[0].mxu0
  %v629 = vadd.f32 %v90, %v628
  %v630 = vpop.f32.mrb[0].mxu0
  %631 = vmatprep.mubr.bf16.mxu0 0
  %632 = vmatmul.mubr.bf16.gmra.mrb[0].mxu0 %v359
  %v633 = vpop.f32.mrb[0].mxu0
  %v634 = vadd.f32 %v90, %v633
  %v635 = vpop.f32.mrb[0].mxu0
  %v636 = vpop.f32.mrb[0].mxu0
  %v637 = vadd.f32 %v90, %v636
  %v638 = vpop.f32.mrb[0].mxu0
  %639 = vmatprep.mubr.bf16.mxu0 0
  %640 = vmatmul.mubr.bf16.gmra.mrb[0].mxu0 %v362
  %v641 = vpop.f32.mrb[0].mxu0
  %v642 = vadd.f32 %v90, %v641
  %v643 = vpop.f32.mrb[0].mxu0
  %v644 = vpop.f32.mrb[0].mxu0
  %v645 = vadd.f32 %v90, %v644
  %v646 = vpop.f32.mrb[0].mxu0
  %647 = vmatprep.mubr.bf16.mxu0 0
  %648 = vmatmul.mubr.bf16.gmra.mrb[0].mxu0 %v365
  %v649 = vpop.f32.mrb[0].mxu0
  %v650 = vadd.f32 %v90, %v649
  %v651 = vpop.f32.mrb[0].mxu0
  %v652 = vpop.f32.mrb[0].mxu0
  %v653 = vadd.f32 %v90, %v652
  %v654 = vpop.f32.mrb[0].mxu0
  %655 = vdwg.mxu0
  %v656 = vmax.f32 %v402, 0.0
  %v657 = vmax.f32 %v405, 0.0
  %v658 = vmax.f32 %v410, 0.0
  %v659 = vmax.f32 %v413, 0.0
  %v660 = vmax.f32 %v418, 0.0
  %v661 = vmax.f32 %v421, 0.0
  %v662 = vmax.f32 %v426, 0.0
  %v663 = vmax.f32 %v429, 0.0
  %v664 = vmax.f32 %v434, 0.0
  %v665 = vmax.f32 %v437, 0.0
  %v666 = vmax.f32 %v442, 0.0
  %v667 = vmax.f32 %v445, 0.0
  %v668 = vmax.f32 %v450, 0.0
  %v669 = vmax.f32 %v453, 0.0
  %v670 = vmax.f32 %v458, 0.0
  %v671 = vmax.f32 %v461, 0.0
  %v672 = vmax.f32 %v466, 0.0
  %v673 = vmax.f32 %v469, 0.0
  %v674 = vmax.f32 %v474, 0.0
  %v675 = vmax.f32 %v477, 0.0
  %v676 = vmax.f32 %v482, 0.0
  %v677 = vmax.f32 %v485, 0.0
  %v678 = vmax.f32 %v490, 0.0
  %v679 = vmax.f32 %v493, 0.0
  %v680 = vmax.f32 %v498, 0.0
  %v681 = vmax.f32 %v501, 0.0
  %v682 = vmax.f32 %v506, 0.0
  %v683 = vmax.f32 %v509, 0.0
  %v684 = vmax.f32 %v514, 0.0
  %v685 = vmax.f32 %v517, 0.0
  %v686 = vmax.f32 %v522, 0.0
  %v687 = vmax.f32 %v525, 0.0
  %v688 = vmax.f32 %v530, 0.0
  %v689 = vmax.f32 %v533, 0.0
  %v690 = vmax.f32 %v538, 0.0
  %v691 = vmax.f32 %v541, 0.0
  %v692 = vmax.f32 %v546, 0.0
  %v693 = vmax.f32 %v549, 0.0
  %v694 = vmax.f32 %v554, 0.0
  %v695 = vmax.f32 %v557, 0.0
  %v696 = vmax.f32 %v562, 0.0
  %v697 = vmax.f32 %v565, 0.0
  %v698 = vmax.f32 %v570, 0.0
  %v699 = vmax.f32 %v573, 0.0
  %v700 = vmax.f32 %v578, 0.0
  %v701 = vmax.f32 %v581, 0.0
  %v702 = vmax.f32 %v586, 0.0
  %v703 = vmax.f32 %v589, 0.0
  %v704 = vmax.f32 %v594, 0.0
  %v705 = vmax.f32 %v597, 0.0
  %v706 = vmax.f32 %v602, 0.0
  %v707 = vmax.f32 %v605, 0.0
  %v708 = vmax.f32 %v610, 0.0
  %v709 = vmax.f32 %v613, 0.0
  %v710 = vmax.f32 %v618, 0.0
  %v711 = vmax.f32 %v621, 0.0
  %v712 = vmax.f32 %v626, 0.0
  %v713 = vmax.f32 %v629, 0.0
  %v714 = vmax.f32 %v634, 0.0
  %v715 = vmax.f32 %v637, 0.0
  %v716 = vmax.f32 %v642, 0.0
  %v717 = vmax.f32 %v645, 0.0
  %v718 = vmax.f32 %v650, 0.0
  %v719 = vmax.f32 %v653, 0.0
  %720 = vst [vmem:[%s3] sm:$0xff] %v656
  %721 = vst [vmem:[%s3 + $0x8] sm:$0xff] %v657
  %722 = vst [vmem:[%s3 + $0x10] sm:$0xff] %v658
  %723 = vst [vmem:[%s3 + $0x18] sm:$0xff] %v659
  %724 = vst [vmem:[%s3 + $0x20] sm:$0xff] %v660
  %725 = vst [vmem:[%s3 + $0x28] sm:$0xff] %v661
  %726 = vst [vmem:[%s3 + $0x30] sm:$0xff] %v662
  %727 = vst [vmem:[%s3 + $0x38] sm:$0xff] %v663
  %728 = vst [vmem:[%s3 + $0x40] sm:$0xff] %v664
  %729 = vst [vmem:[%s3 + $0x48] sm:$0xff] %v665
  %730 = vst [vmem:[%s3 + $0x50] sm:$0xff] %v666
  %731 = vst [vmem:[%s3 + $0x58] sm:$0xff] %v667
  %732 = vst [vmem:[%s3 + $0x60] sm:$0xff] %v668
  %733 = vst [vmem:[%s3 + $0x68] sm:$0xff] %v669
  %734 = vst [vmem:[%s3 + $0x70] sm:$0xff] %v670
  %735 = vst [vmem:[%s3 + $0x78] sm:$0xff] %v671
  %736 = vst [vmem:[%s3 + $0x80] sm:$0xff] %v672
  %737 = vst [vmem:[%s3 + $0x88] sm:$0xff] %v673
  %738 = vst [vmem:[%s3 + $0x90] sm:$0xff] %v674
  %739 = vst [vmem:[%s3 + $0x98] sm:$0xff] %v675
  %740 = vst [vmem:[%s3 + $0xa0] sm:$0xff] %v676
  %741 = vst [vmem:[%s3 + $0xa8] sm:$0xff] %v677
  %742 = vst [vmem:[%s3 + $0xb0] sm:$0xff] %v678
  %743 = vst [vmem:[%s3 + $0xb8] sm:$0xff] %v679
  %744 = vst [vmem:[%s3 + $0xc0] sm:$0xff] %v680
  %745 = vst [vmem:[%s3 + $0xc8] sm:$0xff] %v681
  %746 = vst [vmem:[%s3 + $0xd0] sm:$0xff] %v682
  %747 = vst [vmem:[%s3 + $0xd8] sm:$0xff] %v683
  %748 = vst [vmem:[%s3 + $0xe0] sm:$0xff] %v684
  %749 = vst [vmem:[%s3 + $0xe8] sm:$0xff] %v685
  %750 = vst [vmem:[%s3 + $0xf0] sm:$0xff] %v686
  %751 = vst [vmem:[%s3 + $0xf8] sm:$0xff] %v687
  %752 = vst [vmem:[%s3 + $0x100] sm:$0xff] %v688
  %753 = vst [vmem:[%s3 + $0x108] sm:$0xff] %v689
  %754 = vst [vmem:[%s3 + $0x110] sm:$0xff] %v690
  %755 = vst [vmem:[%s3 + $0x118] sm:$0xff] %v691
  %756 = vst [vmem:[%s3 + $0x120] sm:$0xff] %v692
  %757 = vst [vmem:[%s3 + $0x128] sm:$0xff] %v693
  %758 = vst [vmem:[%s3 + $0x130] sm:$0xff] %v694
  %759 = vst [vmem:[%s3 + $0x138] sm:$0xff] %v695
  %760 = vst [vmem:[%s3 + $0x140] sm:$0xff] %v696
  %761 = vst [vmem:[%s3 + $0x148] sm:$0xff] %v697
  %762 = vst [vmem:[%s3 + $0x150] sm:$0xff] %v698
  %763 = vst [vmem:[%s3 + $0x158] sm:$0xff] %v699
  %764 = vst [vmem:[%s3 + $0x160] sm:$0xff] %v700
  %765 = vst [vmem:[%s3 + $0x168] sm:$0xff] %v701
  %766 = vst [vmem:[%s3 + $0x170] sm:$0xff] %v702
  %767 = vst [vmem:[%s3 + $0x178] sm:$0xff] %v703
  %768 = vst [vmem:[%s3 + $0x180] sm:$0xff] %v704
  %769 = vst [vmem:[%s3 + $0x188] sm:$0xff] %v705
  %770 = vst [vmem:[%s3 + $0x190] sm:$0xff] %v706
  %771 = vst [vmem:[%s3 + $0x198] sm:$0xff] %v707
  %772 = vst [vmem:[%s3 + $0x1a0] sm:$0xff] %v708
  %773 = vst [vmem:[%s3 + $0x1a8] sm:$0xff] %v709
  %774 = vst [vmem:[%s3 + $0x1b0] sm:$0xff] %v710
  %775 = vst [vmem:[%s3 + $0x1b8] sm:$0xff] %v711
  %776 = vst [vmem:[%s3 + $0x1c0] sm:$0xff] %v712
  %777 = vst [vmem:[%s3 + $0x1c8] sm:$0xff] %v713
  %778 = vst [vmem:[%s3 + $0x1d0] sm:$0xff] %v714
  %779 = vst [vmem:[%s3 + $0x1d8] sm:$0xff] %v715
  %780 = vst [vmem:[%s3 + $0x1e0] sm:$0xff] %v716
  %781 = vst [vmem:[%s3 + $0x1e8] sm:$0xff] %v717
  %782 = vst [vmem:[%s3 + $0x1f0] sm:$0xff] %v718
  %783 = vst [vmem:[%s3 + $0x1f8] sm:$0xff] %v719
  // Predicated region
  $region14: #{fwd.2} parent=0 // pred_check
    _
  $region15: #{fwd.2} parent=0 // pred_check_branch
    %785 = sbr.rel (0) target = $region17
  $region16: #{fwd.2} parent=0 // pred_region
    _
  $region17: #{fwd.2} parent=0 // pred_fallthru
    _
  // Predicated region
  $region18: #{fwd.2} parent=0 // pred_check
    _
  $region19: #{fwd.2} parent=0 // pred_check_branch
    %787 = sbr.rel (0) target = $region21
  $region20: #{fwd.2} parent=0 // pred_region
    _
  $region21: #{fwd.2} parent=0 // pred_fallthru
    _

// kernel: fwd.3
$region0: #{fwd.3}
  #allocation0 [shape = 'u32[]', space=smem, size = 0x4, offset = 0x4, fixed_abs, tag = 'smem constant byte address 0x4 - core index']
  #allocation1 [shape = 'u32[144,128]{1,0:T(1,128)}', space=vmem, size = 0x12000, scoped, tag = 'internal scratch']
  %s0 = inlined_call_operand.vmem [shape: bf16[128,80], index: 0, kind: input, shape index: {}]
  %s1 = inlined_call_operand.vmem [shape: bf16[80,128], index: 1, kind: input, shape index: {}]
  %s2 = inlined_call_operand.vmem [shape: f32[1,128], index: 2, kind: input, shape index: {}]
  %s3 = inlined_call_operand.hbm [shape: f32[128,128], index: 3, kind: output, shape index: {}]
  %s4 = sld [smem:[#allocation0]]
  $region22: #{fwd.3} parent=0
    _
  %s6 = ssub.s32 1, %s4
  %s7 = scalar_select 0, %s6, %s4
  $region1: #{fwd.3} parent=0
    #allocation2 [shape = 'u8[65536]{0}', space=vmem, size = 0x10000, scoped, tag = 'output window, operand 0, single buffered']
    #allocation3 [shape = 's32[1]{0}', space=sflag, size = 0x4, scoped, tag = 'scoped memory for fwd.3']
    %8 = vsyncpa [#allocation3], 0
    // Predicated region
    $region2: #{fwd.3} parent=1 // pred_check
      _
    $region3: #{fwd.3} parent=1 // pred_check_branch
      %10 = sbr.rel (0) target = $region5
    $region4: #{fwd.3} parent=1 // pred_region
      _
    $region5: #{fwd.3} parent=1 // pred_fallthru
      _
    // Predicated region
    $region6: #{fwd.3} parent=1 // pred_check
      _
    $region7: #{fwd.3} parent=1 // pred_check_branch
      %12 = sbr.rel (0) target = $region9
    $region8: #{fwd.3} parent=1 // pred_region
      _
    $region9: #{fwd.3} parent=1 // pred_fallthru
      _
    // Predicated region
    $region10: #{fwd.3} parent=1 // pred_check
      _
    $region11: #{fwd.3} parent=1 // pred_check_branch
      %14 = sbr.rel (0) target = $region13
    $region12: #{fwd.3} parent=1 // pred_region
      _
    $region13: #{fwd.3} parent=1 // pred_fallthru
      _
    %v16 = vld [vmem:[%s0] sm:$0xf]
    %v17 = vld [vmem:[%s0 + $0x4] sm:$0xf]
    %v18 = vld [vmem:[%s0 + $0x8] sm:$0xf]
    %v19 = vld [vmem:[%s0 + $0xc] sm:$0xf]
    %v20 = vld [vmem:[%s0 + $0x10] sm:$0xf]
    %v21 = vld [vmem:[%s0 + $0x14] sm:$0xf]
    %v22 = vld [vmem:[%s0 + $0x18] sm:$0xf]
    %v23 = vld [vmem:[%s0 + $0x1c] sm:$0xf]
    %v24 = vld [vmem:[%s0 + $0x20] sm:$0xf]
    %v25 = vld [vmem:[%s0 + $0x24] sm:$0xf]
    %v26 = vld [vmem:[%s0 + $0x28] sm:$0xf]
    %v27 = vld [vmem:[%s0 + $0x2c] sm:$0xf]
    %v28 = vld [vmem:[%s0 + $0x30] sm:$0xf]
    %v29 = vld [vmem:[%s0 + $0x34] sm:$0xf]
    %v30 = vld [vmem:[%s0 + $0x38] sm:$0xf]
    %v31 = vld [vmem:[%s0 + $0x3c] sm:$0xf]
    %v32 = vld [vmem:[%s1] sm:$0xf]
    %v33 = vld [vmem:[%s1 + $0x4] sm:$0xf]
    %v34 = vld [vmem:[%s1 + $0x8] sm:$0xf]
    %v35 = vld [vmem:[%s1 + $0xc] sm:$0xf]
    %v36 = vld [vmem:[%s1 + $0x10] sm:$0xf]
    %v37 = vld [vmem:[%s1 + $0x14] sm:$0xf]
    %v38 = vld [vmem:[%s1 + $0x18] sm:$0xf]
    %v39 = vld [vmem:[%s1 + $0x1c] sm:$0xf]
    %v40 = vld [vmem:[%s1 + $0x20] sm:$0xf]
    %v41 = vld [vmem:[%s1 + $0x24] sm:$0xf]
    %v42 = vld [vmem:[%s2] sm:$0x1]
    %v44 = vlaneseq
    %v45 = vshrl.u32 %v44, 7
    %v46 = vsub.s32 0, %v45
    %v47 = vrot.slane %v42, %v46
    %v65 = vunpack.c.l.b16 %v16
    %v66 = vunpack.c.l.b16 %v17
    %v67 = vunpack.c.l.b16 %v18
    %v68 = vunpack.c.l.b16 %v19
    %v69 = vunpack.c.l.b16 %v20
    %v70 = vunpack.c.l.b16 %v21
    %v71 = vunpack.c.l.b16 %v22
    %v72 = vunpack.c.l.b16 %v23
    %v73 = vunpack.c.l.b16 %v24
    %v74 = vunpack.c.l.b16 %v25
    %v75 = vunpack.c.l.b16 %v26
    %v76 = vunpack.c.l.b16 %v27
    %v77 = vunpack.c.l.b16 %v28
    %v78 = vunpack.c.l.b16 %v29
    %v79 = vunpack.c.l.b16 %v30
    %v80 = vunpack.c.l.b16 %v31
    %v81 = vpack.c.b16 %v66, %v65
    %v82 = vpack.c.b16 %v68, %v67
    %v83 = vpack.c.b16 %v70, %v69
    %v84 = vpack.c.b16 %v72, %v71
    %v85 = vpack.c.b16 %v74, %v73
    %v86 = vpack.c.b16 %v76, %v75
    %v87 = vpack.c.b16 %v78, %v77
    %v88 = vpack.c.b16 %v80, %v79
    %v99 = vunpack.c.l.b16 %v32
    %v100 = vunpack.c.l.b16 %v33
    %v101 = vunpack.c.l.b16 %v34
    %v102 = vunpack.c.l.b16 %v35
    %v103 = vunpack.c.l.b16 %v36
    %v104 = vunpack.c.l.b16 %v37
    %v105 = vunpack.c.l.b16 %v38
    %v106 = vunpack.c.l.b16 %v39
    %v107 = vunpack.c.l.b16 %v40
    %v108 = vunpack.c.l.b16 %v41
    %v109 = vpack.c.b16 %v100, %v99
    %v110 = vpack.c.b16 %v102, %v101
    %v111 = vpack.c.b16 %v104, %v103
    %v112 = vpack.c.b16 %v106, %v105
    %v113 = vpack.c.b16 %v108, %v107
    %vm119 = vcmask 654336
    %v121 = vsel %vm119, %v81, 0
    %v124 = vsel %vm119, %v82, 0
    %v127 = vsel %vm119, %v83, 0
    %v130 = vsel %vm119, %v84, 0
    %v133 = vsel %vm119, %v85, 0
    %v136 = vsel %vm119, %v86, 0
    %v139 = vsel %vm119, %v87, 0
    %v142 = vsel %vm119, %v88, 0
    %144 = vmatprep.subr.bf16.mxu0 0
    %145 = vmatpush1.bf16.msra.mxu0 %v109
    %146 = vmatprep.subr.bf16.mxu0 0
    %147 = vmatpush1.bf16.msra.mxu0 %v110
    %148 = vmatprep.subr.bf16.mxu0 0
    %149 = vmatpush1.bf16.msra.mxu0 %v111
    %150 = vmatprep.subr.bf16.mxu0 0
    %151 = vmatpush1.bf16.msra.mxu0 %v112
    %152 = vmatprep.subr.bf16.mxu0 0
    %153 = vmatpush1.bf16.msra.mxu0 %v113
    %154 = vmatprep.subr.bf16.mxu0 0
    %155 = vmatpush1.bf16.msra.mxu0 0
    %156 = vmatprep.subr.bf16.mxu0 0
    %157 = vmatpush1.bf16.msra.mxu0 0
    %158 = vmatprep.subr.bf16.mxu0 0
    %159 = vmatpush1.bf16.msra.mxu0 0
    %160 = vmatprep.subr.bf16.mxu0 0
    %161 = vmatpush1.bf16.msra.mxu0 0
    %162 = vmatprep.subr.bf16.mxu0 0
    %163 = vmatpush1.bf16.msra.mxu0 0
    %164 = vmatprep.subr.bf16.mxu0 0
    %165 = vmatpush1.bf16.msra.mxu0 0
    %166 = vmatprep.subr.bf16.mxu0 0
    %167 = vmatpush1.bf16.msra.mxu0 0
    %168 = vmatprep.subr.bf16.mxu0 0
    %169 = vmatpush1.bf16.msra.mxu0 0
    %170 = vmatprep.subr.bf16.mxu0 0
    %171 = vmatpush1.bf16.msra.mxu0 0
    %172 = vmatprep.subr.bf16.mxu0 0
    %173 = vmatpush1.bf16.msra.mxu0 0
    %174 = vmatprep.subr.bf16.mxu0 0
    %175 = vmatpush1.bf16.msra.mxu0 0
    %176 = vmatprep.mubr.bf16.mxu0 0
    %177 = vmatmul.mubr.bf16.gmra.mrb[0].mxu0 %v121
    %v178 = vpop.f32.mrb[0].mxu0
    %v179 = vadd.f32 %v47, %v178
    %v180 = vpop.f32.mrb[0].mxu0
    %v181 = vpop.f32.mrb[0].mxu0
    %v182 = vadd.f32 %v47, %v181
    %v183 = vpop.f32.mrb[0].mxu0
    %184 = vmatprep.mubr.bf16.mxu0 0
    %185 = vmatmul.mubr.bf16.gmra.mrb[0].mxu0 %v124
    %v186 = vpop.f32.mrb[0].mxu0
    %v187 = vadd.f32 %v47, %v186
    %v188 = vpop.f32.mrb[0].mxu0
    %v189 = vpop.f32.mrb[0].mxu0
    %v190 = vadd.f32 %v47, %v189
    %v191 = vpop.f32.mrb[0].mxu0
    %192 = vmatprep.mubr.bf16.mxu0 0
    %193 = vmatmul.mubr.bf16.gmra.mrb[0].mxu0 %v127
    %v194 = vpop.f32.mrb[0].mxu0
    %v195 = vadd.f32 %v47, %v194
    %v196 = vpop.f32.mrb[0].mxu0
    %v197 = vpop.f32.mrb[0].mxu0
    %v198 = vadd.f32 %v47, %v197
    %v199 = vpop.f32.mrb[0].mxu0
    %200 = vmatprep.mubr.bf16.mxu0 0
    %201 = vmatmul.mubr.bf16.gmra.mrb[0].mxu0 %v130
    %v202 = vpop.f32.mrb[0].mxu0
    %v203 = vadd.f32 %v47, %v202
    %v204 = vpop.f32.mrb[0].mxu0
    %v205 = vpop.f32.mrb[0].mxu0
    %v206 = vadd.f32 %v47, %v205
    %v207 = vpop.f32.mrb[0].mxu0
    %208 = vmatprep.mubr.bf16.mxu0 0
    %209 = vmatmul.mubr.bf16.gmra.mrb[0].mxu0 %v133
    %v210 = vpop.f32.mrb[0].mxu0
    %v211 = vadd.f32 %v47, %v210
    %v212 = vpop.f32.mrb[0].mxu0
    %v213 = vpop.f32.mrb[0].mxu0
    %v214 = vadd.f32 %v47, %v213
    %v215 = vpop.f32.mrb[0].mxu0
    %216 = vmatprep.mubr.bf16.mxu0 0
    %217 = vmatmul.mubr.bf16.gmra.mrb[0].mxu0 %v136
    %v218 = vpop.f32.mrb[0].mxu0
    %v219 = vadd.f32 %v47, %v218
    %v220 = vpop.f32.mrb[0].mxu0
    %v221 = vpop.f32.mrb[0].mxu0
    %v222 = vadd.f32 %v47, %v221
    %v223 = vpop.f32.mrb[0].mxu0
    %224 = vmatprep.mubr.bf16.mxu0 0
    %225 = vmatmul.mubr.bf16.gmra.mrb[0].mxu0 %v139
    %v226 = vpop.f32.mrb[0].mxu0
    %v227 = vadd.f32 %v47, %v226
    %v228 = vpop.f32.mrb[0].mxu0
    %v229 = vpop.f32.mrb[0].mxu0
    %v230 = vadd.f32 %v47, %v229
    %v231 = vpop.f32.mrb[0].mxu0
    %232 = vmatprep.mubr.bf16.mxu0 0
    %233 = vmatmul.mubr.bf16.gmra.mrb[0].mxu0 %v142
    %v234 = vpop.f32.mrb[0].mxu0
    %v235 = vadd.f32 %v47, %v234
    %v236 = vpop.f32.mrb[0].mxu0
    %v237 = vpop.f32.mrb[0].mxu0
    %v238 = vadd.f32 %v47, %v237
    %v239 = vpop.f32.mrb[0].mxu0
    %240 = vdwg.mxu0
    %v241 = vmax.f32 %v179, 0.0
    %v242 = vmax.f32 %v182, 0.0
    %v243 = vmax.f32 %v187, 0.0
    %v244 = vmax.f32 %v190, 0.0
    %v245 = vmax.f32 %v195, 0.0
    %v246 = vmax.f32 %v198, 0.0
    %v247 = vmax.f32 %v203, 0.0
    %v248 = vmax.f32 %v206, 0.0
    %v249 = vmax.f32 %v211, 0.0
    %v250 = vmax.f32 %v214, 0.0
    %v251 = vmax.f32 %v219, 0.0
    %v252 = vmax.f32 %v222, 0.0
    %v253 = vmax.f32 %v227, 0.0
    %v254 = vmax.f32 %v230, 0.0
    %v255 = vmax.f32 %v235, 0.0
    %v256 = vmax.f32 %v238, 0.0
    %257 = vst [vmem:[#allocation2] sm:$0xff] %v241
    %258 = vst [vmem:[#allocation2 + $0x8] sm:$0xff] %v242
    %259 = vst [vmem:[#allocation2 + $0x10] sm:$0xff] %v243
    %260 = vst [vmem:[#allocation2 + $0x18] sm:$0xff] %v244
    %261 = vst [vmem:[#allocation2 + $0x20] sm:$0xff] %v245
    %262 = vst [vmem:[#allocation2 + $0x28] sm:$0xff] %v246
    %263 = vst [vmem:[#allocation2 + $0x30] sm:$0xff] %v247
    %264 = vst [vmem:[#allocation2 + $0x38] sm:$0xff] %v248
    %265 = vst [vmem:[#allocation2 + $0x40] sm:$0xff] %v249
    %266 = vst [vmem:[#allocation2 + $0x48] sm:$0xff] %v250
    %267 = vst [vmem:[#allocation2 + $0x50] sm:$0xff] %v251
    %268 = vst [vmem:[#allocation2 + $0x58] sm:$0xff] %v252
    %269 = vst [vmem:[#allocation2 + $0x60] sm:$0xff] %v253
    %270 = vst [vmem:[#allocation2 + $0x68] sm:$0xff] %v254
    %271 = vst [vmem:[#allocation2 + $0x70] sm:$0xff] %v255
    %272 = vst [vmem:[#allocation2 + $0x78] sm:$0xff] %v256
    // Predicated region
    $region14: #{fwd.3} parent=1 // pred_check
      _
    $region15: #{fwd.3} parent=1 // pred_check_branch
      %274 = sbr.rel (0) target = $region17
    $region16: #{fwd.3} parent=1 // pred_region
      %s276 = ssub.s32 2048, 2048
      %277 = vsyncadd [#allocation3], %s276
      %s278 = sshll.u32 [#allocation2], 4
      %s279 = int_to_ptr.vmem [resolvable:$true] %s278
      %284 = dma.vmem_to_hbm [thread:$0]  %s279, 2048, %s3, [#allocation3], 128, 128, 8
    $region17: #{fwd.3} parent=1 // pred_fallthru
      _
    // Predicated region
    $region18: #{fwd.3} parent=1 // pred_check
      _
    $region19: #{fwd.3} parent=1 // pred_check_branch
      %286 = sbr.rel (0) target = $region21
    $region20: #{fwd.3} parent=1 // pred_region
      %287 = dma.done [#allocation3], 2048
    $region21: #{fwd.3} parent=1 // pred_fallthru
      _
    %288 = vsyncpa [#allocation3], 1

</llo_original>
